<compile_context>
chip_gen: v7x
topology: tpu7x:2x2x1
jax: 0.10.0
libtpu: 0.0.40
codegen_flags: <defaults>
</compile_context>

<pallas_src>
import functools

import jax
import jax.numpy as jnp
from jax.experimental import pallas as pl
from jax.experimental.pallas import tpu as pltpu


def _round_up(n, m):
    return ((n + m - 1) // m) * m


def _mish(x):
    # mish(x) = x * tanh(softplus(x)).  Single-exp formulation:
    #   t = exp(x); u = (1+t)^2; tanh(log(1+t)) = (u-1)/(u+1)
    xs = jnp.minimum(x, 20.0)                 # overflow guard for exp
    t = jnp.exp(xs)
    u = (1.0 + t) * (1.0 + t)
    y = x * (u - 1.0) / (u + 1.0)
    return jnp.where(x > 20.0, x, y)          # tanh(softplus(x)) ~= 1 there


def _mlp_logits(x_ref, w1_ref, b1_ref, w2_ref, b2_ref, w3_ref, b3_ref,
                w4_ref, b4_ref):
    # bf16 matmul operands (native MXU dtype), f32 accumulation + elementwise.
    x = x_ref[...].astype(jnp.bfloat16)
    h = jnp.dot(x, w1_ref[...], preferred_element_type=jnp.float32) + b1_ref[...]
    h = _mish(h)
    h = jnp.dot(h.astype(jnp.bfloat16), w2_ref[...],
                preferred_element_type=jnp.float32) + b2_ref[...]
    h = _mish(h)
    h = jnp.dot(h.astype(jnp.bfloat16), w3_ref[...],
                preferred_element_type=jnp.float32) + b3_ref[...]
    h = _mish(h)
    logits = jnp.dot(h.astype(jnp.bfloat16), w4_ref[...],
                     preferred_element_type=jnp.float32) + b4_ref[...]
    return logits


def mlp_softmax_kernel(x_ref, w1_ref, b1_ref, w2_ref, b2_ref, w3_ref, b3_ref,
                       w4_ref, b4_ref, probs_ref):
    logits = _mlp_logits(x_ref, w1_ref, b1_ref, w2_ref, b2_ref,
                         w3_ref, b3_ref, w4_ref, b4_ref)
    m = jnp.max(logits, axis=-1, keepdims=True)
    e = jnp.exp(logits - m)
    denom = jnp.sum(e, axis=-1, keepdims=True)
    probs_ref[...] = e / denom                # exact divide: rows sum to 1


def mlp_argmax_kernel(x_ref, w1_ref, b1_ref, w2_ref, b2_ref, w3_ref, b3_ref,
                      w4_ref, b4_ref, maxp_ref, col_ref):
    # Eval path: no probs writeback. Per row we only need
    #   max prob  = exp(m - m) / denom = 1 / denom
    #   argmax col = first column where logits == row max (softmax is monotone
    #                per row, so logits argmax == probs argmax).
    logits = _mlp_logits(x_ref, w1_ref, b1_ref, w2_ref, b2_ref,
                         w3_ref, b3_ref, w4_ref, b4_ref)
    m = jnp.max(logits, axis=-1, keepdims=True)
    denom = jnp.sum(jnp.exp(logits - m), axis=-1, keepdims=True)
    maxp_ref[...] = 1.0 / denom
    col_ids = jax.lax.broadcasted_iota(jnp.int32, logits.shape, 1)
    big = jnp.int32(logits.shape[-1])
    col_ref[...] = jnp.min(jnp.where(logits == m, col_ids, big),
                           axis=-1, keepdims=True)


def prepare_params(params):
    """One-time weight prep (hoisted out of the forward): bf16 matmul operands,
    f32 biases. Call once after init/update, reuse across forward calls."""
    prepared = {}
    for i in range(1, 5):
        prepared[f"w{i}"] = params[f"w{i}"].astype(jnp.bfloat16)
        prepared[f"b{i}"] = params[f"b{i}"].astype(jnp.float32)
    return prepared


@functools.partial(jax.jit, static_argnames=("train_mode", "tile_b"))
def neural_network_forward(x, prepared, train_mode=True, tile_b=1024):
    """Fused MLP + softmax forward pass.

    x: [B, D_in] float32; prepared from prepare_params(init_params(...)).
    train_mode=True  -> probs [B, n_actions]  (parameters of Categorical(dist))
    train_mode=False -> scalar flat argmax over probs (matches torch.argmax(dist))
    """
    B, d_in = x.shape
    n_actions = prepared["w4"].shape[1]

    # Batch tiling: one grid axis over B (pipelined); weight blocks never move,
    # so they stay VMEM-resident across grid steps.
    b_ceil = _round_up(B, 8)
    tb = min(tile_b, b_ceil)
    if b_ceil >= 1024:
        # Guarantee >=2 grid steps for large batches so "parallel" actually
        # splits work across v7x's two TensorCores.
        tb = min(tb, _round_up(pl.cdiv(b_ceil, 2), 8))
    b_pad = _round_up(B, tb)
    if b_pad != B:
        x = jnp.pad(x, ((0, b_pad - B), (0, 0)))
    grid = (b_pad // tb,)

    batch_spec = pl.BlockSpec((tb, d_in), lambda i: (i, 0))
    const_spec = lambda a: pl.BlockSpec(a.shape, lambda i: (0, 0))
    weight_args = (prepared["w1"], prepared["b1"], prepared["w2"], prepared["b2"],
                   prepared["w3"], prepared["b3"], prepared["w4"], prepared["b4"])
    in_specs = [batch_spec] + [const_spec(a) for a in weight_args]
    compiler_params = pltpu.CompilerParams(dimension_semantics=("parallel",))

    if train_mode:
        probs = pl.pallas_call(
            mlp_softmax_kernel,
            out_shape=jax.ShapeDtypeStruct((b_pad, n_actions), jnp.float32),
            grid=grid,
            in_specs=in_specs,
            out_specs=pl.BlockSpec((tb, n_actions), lambda i: (i, 0)),
            compiler_params=compiler_params,
        )(x, *weight_args)
        # PyTorch returns Categorical(probs); probs fully determine that dist.
        return probs[:B]

    # Eval: per-row (max prob, argmax column), 8 bytes/row written.
    maxp, col = pl.pallas_call(
        mlp_argmax_kernel,
        out_shape=(jax.ShapeDtypeStruct((b_pad, 1), jnp.float32),
                   jax.ShapeDtypeStruct((b_pad, 1), jnp.int32)),
        grid=grid,
        in_specs=in_specs,
        out_specs=(pl.BlockSpec((tb, 1), lambda i: (i, 0)),
                   pl.BlockSpec((tb, 1), lambda i: (i, 0))),
        compiler_params=compiler_params,
    )(x, *weight_args)
    # torch.argmax(dist) flattens -> flat index over [B, n_actions].
    r = jnp.argmax(maxp[:B, 0])
    return r.astype(jnp.int32) * n_actions + col[r, 0]


def init_params(key, input_dim, fc_dims, n_actions):
    """Deterministic PyTorch-Linear-style init (uniform +/- 1/sqrt(fan_in))."""
    dims = [(input_dim, fc_dims), (fc_dims, fc_dims),
            (fc_dims, fc_dims), (fc_dims, n_actions)]
    params = {}
    for i, (din, dout) in enumerate(dims, start=1):
        key, kw, kb = jax.random.split(key, 3)
        bound = 1.0 / jnp.sqrt(din)
        params[f"w{i}"] = jax.random.uniform(
            kw, (din, dout), jnp.float32, -bound, bound)
        params[f"b{i}"] = jax.random.uniform(
            kb, (1, dout), jnp.float32, -bound, bound)
    return params


if __name__ == "__main__":
    key = jax.random.PRNGKey(0)
    B, INPUT_DIM, FC_DIMS, N_ACTIONS = 8, 16, 64, 8

    kx, kp = jax.random.split(key)
    x = jax.random.normal(kx, (B, INPUT_DIM), jnp.float32)
    params = init_params(kp, INPUT_DIM, FC_DIMS, N_ACTIONS)
    prepared = prepare_params(params)   # one-time weight prep, reused per call

    probs = neural_network_forward(x, prepared, train_mode=True)
    probs = jax.block_until_ready(probs)
    assert probs.shape == (B, N_ACTIONS)
    # Exact divide in the final normalization -> tight row-sum check.
    assert jnp.allclose(jnp.sum(probs, axis=-1), 1.0, atol=1e-3)
    assert bool(jnp.all(probs >= 0.0))

    action = neural_network_forward(x, prepared, train_mode=False)
    action = jax.block_until_ready(action)
    assert action.shape == ()  # flat argmax index, matching torch.argmax(dist)
    # Fused eval argmax must agree with argmax over the train-mode probs.
    assert int(action) == int(jnp.argmax(probs))

    print("KERNEL_OK")
</pallas_src>

<mosaic_0001>
module attributes {stable_mosaic.version = 11 : i64} {
  func.func @mlp_softmax_kernel(%arg0: i32, %arg1: memref<8x16xf32, #tpu.memory_space<vmem>>, %arg2: memref<16x64xbf16, #tpu.memory_space<vmem>>, %arg3: memref<1x64xf32, #tpu.memory_space<vmem>>, %arg4: memref<64x64xbf16, #tpu.memory_space<vmem>>, %arg5: memref<1x64xf32, #tpu.memory_space<vmem>>, %arg6: memref<64x64xbf16, #tpu.memory_space<vmem>>, %arg7: memref<1x64xf32, #tpu.memory_space<vmem>>, %arg8: memref<64x8xbf16, #tpu.memory_space<vmem>>, %arg9: memref<1x8xf32, #tpu.memory_space<vmem>>, %arg10: memref<8x8xf32, #tpu.memory_space<vmem>>) attributes {dimension_semantics = [#tpu.dimension_semantics<parallel>], iteration_bounds = array<i64: 1>, scalar_prefetch = 0 : i64, scratch_operands = 0 : i64, tpu.core_type = #tpu.core_type<tc>, window_params = [{transform_indices = @transform_0, window_bounds = array<i64: 8, 16>}, {pipeline_mode = #tpu.pipeline_mode<synchronous>, transform_indices = @transform_1, window_bounds = array<i64: 16, 64>}, {pipeline_mode = #tpu.pipeline_mode<synchronous>, transform_indices = @transform_2, window_bounds = array<i64: 1, 64>}, {pipeline_mode = #tpu.pipeline_mode<synchronous>, transform_indices = @transform_3, window_bounds = array<i64: 64, 64>}, {pipeline_mode = #tpu.pipeline_mode<synchronous>, transform_indices = @transform_4, window_bounds = array<i64: 1, 64>}, {pipeline_mode = #tpu.pipeline_mode<synchronous>, transform_indices = @transform_5, window_bounds = array<i64: 64, 64>}, {pipeline_mode = #tpu.pipeline_mode<synchronous>, transform_indices = @transform_6, window_bounds = array<i64: 1, 64>}, {pipeline_mode = #tpu.pipeline_mode<synchronous>, transform_indices = @transform_7, window_bounds = array<i64: 64, 8>}, {pipeline_mode = #tpu.pipeline_mode<synchronous>, transform_indices = @transform_8, window_bounds = array<i64: 1, 8>}, {transform_indices = @transform_9, window_bounds = array<i64: 8, 8>}]} {
    %c0 = arith.constant 0 : index
    %c0_0 = arith.constant 0 : index
    %0 = vector.load %arg1[%c0, %c0_0] : memref<8x16xf32, #tpu.memory_space<vmem>>, vector<8x16xf32>
    %1 = arith.truncf %0 : vector<8x16xf32> to vector<8x16xbf16>
    %c0_1 = arith.constant 0 : index
    %c0_2 = arith.constant 0 : index
    %2 = vector.load %arg2[%c0_1, %c0_2] : memref<16x64xbf16, #tpu.memory_space<vmem>>, vector<16x64xbf16>
    %cst = arith.constant dense<0.000000e+00> : vector<8x64xf32>
    %3 = tpu.matmul %1, %2, %cst {dimension_numbers = #tpu.dot_dimension_numbers<[1], [0], [0], [1], [0, 0, 1, 1], [], []>} : vector<8x16xbf16>, vector<16x64xbf16>, vector<8x64xf32> -> vector<8x64xf32>
    %c0_3 = arith.constant 0 : index
    %c0_4 = arith.constant 0 : index
    %4 = vector.load %arg3[%c0_3, %c0_4] : memref<1x64xf32, #tpu.memory_space<vmem>>, vector<1x64xf32>
    %5 = vector.broadcast %4 : vector<1x64xf32> to vector<8x64xf32>
    %6 = arith.addf %3, %5 : vector<8x64xf32>
    %cst_5 = arith.constant 2.000000e+01 : f32
    %7 = vector.broadcast %cst_5 : f32 to vector<8x64xf32>
    %8 = arith.minimumf %6, %7 : vector<8x64xf32>
    %9 = math.exp %8 : vector<8x64xf32>
    %cst_6 = arith.constant 1.000000e+00 : f32
    %10 = vector.broadcast %cst_6 : f32 to vector<8x64xf32>
    %11 = arith.addf %10, %9 : vector<8x64xf32>
    %cst_7 = arith.constant 1.000000e+00 : f32
    %12 = vector.broadcast %cst_7 : f32 to vector<8x64xf32>
    %13 = arith.addf %12, %9 : vector<8x64xf32>
    %14 = arith.mulf %11, %13 : vector<8x64xf32>
    %cst_8 = arith.constant 1.000000e+00 : f32
    %15 = vector.broadcast %cst_8 : f32 to vector<8x64xf32>
    %16 = arith.subf %14, %15 : vector<8x64xf32>
    %17 = arith.mulf %6, %16 : vector<8x64xf32>
    %cst_9 = arith.constant 1.000000e+00 : f32
    %18 = vector.broadcast %cst_9 : f32 to vector<8x64xf32>
    %19 = arith.addf %14, %18 : vector<8x64xf32>
    %20 = arith.divf %17, %19 : vector<8x64xf32>
    %cst_10 = arith.constant 2.000000e+01 : f32
    %21 = vector.broadcast %cst_10 : f32 to vector<8x64xf32>
    %22 = arith.cmpf ogt, %6, %21 : vector<8x64xf32>
    %23 = arith.select %22, %6, %20 : vector<8x64xi1>, vector<8x64xf32>
    %24 = arith.truncf %23 : vector<8x64xf32> to vector<8x64xbf16>
    %c0_11 = arith.constant 0 : index
    %c0_12 = arith.constant 0 : index
    %25 = vector.load %arg4[%c0_11, %c0_12] : memref<64x64xbf16, #tpu.memory_space<vmem>>, vector<64x64xbf16>
    %cst_13 = arith.constant dense<0.000000e+00> : vector<8x64xf32>
    %26 = tpu.matmul %24, %25, %cst_13 {dimension_numbers = #tpu.dot_dimension_numbers<[1], [0], [0], [1], [0, 0, 1, 1], [], []>} : vector<8x64xbf16>, vector<64x64xbf16>, vector<8x64xf32> -> vector<8x64xf32>
    %c0_14 = arith.constant 0 : index
    %c0_15 = arith.constant 0 : index
    %27 = vector.load %arg5[%c0_14, %c0_15] : memref<1x64xf32, #tpu.memory_space<vmem>>, vector<1x64xf32>
    %28 = vector.broadcast %27 : vector<1x64xf32> to vector<8x64xf32>
    %29 = arith.addf %26, %28 : vector<8x64xf32>
    %cst_16 = arith.constant 2.000000e+01 : f32
    %30 = vector.broadcast %cst_16 : f32 to vector<8x64xf32>
    %31 = arith.minimumf %29, %30 : vector<8x64xf32>
    %32 = math.exp %31 : vector<8x64xf32>
    %cst_17 = arith.constant 1.000000e+00 : f32
    %33 = vector.broadcast %cst_17 : f32 to vector<8x64xf32>
    %34 = arith.addf %33, %32 : vector<8x64xf32>
    %cst_18 = arith.constant 1.000000e+00 : f32
    %35 = vector.broadcast %cst_18 : f32 to vector<8x64xf32>
    %36 = arith.addf %35, %32 : vector<8x64xf32>
    %37 = arith.mulf %34, %36 : vector<8x64xf32>
    %cst_19 = arith.constant 1.000000e+00 : f32
    %38 = vector.broadcast %cst_19 : f32 to vector<8x64xf32>
    %39 = arith.subf %37, %38 : vector<8x64xf32>
    %40 = arith.mulf %29, %39 : vector<8x64xf32>
    %cst_20 = arith.constant 1.000000e+00 : f32
    %41 = vector.broadcast %cst_20 : f32 to vector<8x64xf32>
    %42 = arith.addf %37, %41 : vector<8x64xf32>
    %43 = arith.divf %40, %42 : vector<8x64xf32>
    %cst_21 = arith.constant 2.000000e+01 : f32
    %44 = vector.broadcast %cst_21 : f32 to vector<8x64xf32>
    %45 = arith.cmpf ogt, %29, %44 : vector<8x64xf32>
    %46 = arith.select %45, %29, %43 : vector<8x64xi1>, vector<8x64xf32>
    %47 = arith.truncf %46 : vector<8x64xf32> to vector<8x64xbf16>
    %c0_22 = arith.constant 0 : index
    %c0_23 = arith.constant 0 : index
    %48 = vector.load %arg6[%c0_22, %c0_23] : memref<64x64xbf16, #tpu.memory_space<vmem>>, vector<64x64xbf16>
    %cst_24 = arith.constant dense<0.000000e+00> : vector<8x64xf32>
    %49 = tpu.matmul %47, %48, %cst_24 {dimension_numbers = #tpu.dot_dimension_numbers<[1], [0], [0], [1], [0, 0, 1, 1], [], []>} : vector<8x64xbf16>, vector<64x64xbf16>, vector<8x64xf32> -> vector<8x64xf32>
    %c0_25 = arith.constant 0 : index
    %c0_26 = arith.constant 0 : index
    %50 = vector.load %arg7[%c0_25, %c0_26] : memref<1x64xf32, #tpu.memory_space<vmem>>, vector<1x64xf32>
    %51 = vector.broadcast %50 : vector<1x64xf32> to vector<8x64xf32>
    %52 = arith.addf %49, %51 : vector<8x64xf32>
    %cst_27 = arith.constant 2.000000e+01 : f32
    %53 = vector.broadcast %cst_27 : f32 to vector<8x64xf32>
    %54 = arith.minimumf %52, %53 : vector<8x64xf32>
    %55 = math.exp %54 : vector<8x64xf32>
    %cst_28 = arith.constant 1.000000e+00 : f32
    %56 = vector.broadcast %cst_28 : f32 to vector<8x64xf32>
    %57 = arith.addf %56, %55 : vector<8x64xf32>
    %cst_29 = arith.constant 1.000000e+00 : f32
    %58 = vector.broadcast %cst_29 : f32 to vector<8x64xf32>
    %59 = arith.addf %58, %55 : vector<8x64xf32>
    %60 = arith.mulf %57, %59 : vector<8x64xf32>
    %cst_30 = arith.constant 1.000000e+00 : f32
    %61 = vector.broadcast %cst_30 : f32 to vector<8x64xf32>
    %62 = arith.subf %60, %61 : vector<8x64xf32>
    %63 = arith.mulf %52, %62 : vector<8x64xf32>
    %cst_31 = arith.constant 1.000000e+00 : f32
    %64 = vector.broadcast %cst_31 : f32 to vector<8x64xf32>
    %65 = arith.addf %60, %64 : vector<8x64xf32>
    %66 = arith.divf %63, %65 : vector<8x64xf32>
    %cst_32 = arith.constant 2.000000e+01 : f32
    %67 = vector.broadcast %cst_32 : f32 to vector<8x64xf32>
    %68 = arith.cmpf ogt, %52, %67 : vector<8x64xf32>
    %69 = arith.select %68, %52, %66 : vector<8x64xi1>, vector<8x64xf32>
    %70 = arith.truncf %69 : vector<8x64xf32> to vector<8x64xbf16>
    %c0_33 = arith.constant 0 : index
    %c0_34 = arith.constant 0 : index
    %71 = vector.load %arg8[%c0_33, %c0_34] : memref<64x8xbf16, #tpu.memory_space<vmem>>, vector<64x8xbf16>
    %cst_35 = arith.constant dense<0.000000e+00> : vector<8x8xf32>
    %72 = tpu.matmul %70, %71, %cst_35 {dimension_numbers = #tpu.dot_dimension_numbers<[1], [0], [0], [1], [0, 0, 1, 1], [], []>} : vector<8x64xbf16>, vector<64x8xbf16>, vector<8x8xf32> -> vector<8x8xf32>
    %c0_36 = arith.constant 0 : index
    %c0_37 = arith.constant 0 : index
    %73 = vector.load %arg9[%c0_36, %c0_37] : memref<1x8xf32, #tpu.memory_space<vmem>>, vector<1x8xf32>
    %74 = vector.broadcast %73 : vector<1x8xf32> to vector<8x8xf32>
    %75 = arith.addf %72, %74 : vector<8x8xf32>
    %cst_38 = arith.constant dense<0xFF800000> : vector<8xf32>
    %76 = vector.multi_reduction <maximumf>, %75, %cst_38 [1] : vector<8x8xf32> to vector<8xf32>
    %77 = vector.shape_cast %76 : vector<8xf32> to vector<8x1xf32>
    %78 = vector.broadcast %77 : vector<8x1xf32> to vector<8x8xf32>
    %79 = arith.subf %75, %78 : vector<8x8xf32>
    %80 = math.exp %79 : vector<8x8xf32>
    %cst_39 = arith.constant dense<0.000000e+00> : vector<8xf32>
    %81 = vector.multi_reduction <add>, %80, %cst_39 [1] : vector<8x8xf32> to vector<8xf32>
    %82 = vector.shape_cast %81 : vector<8xf32> to vector<8x1xf32>
    %83 = vector.broadcast %82 : vector<8x1xf32> to vector<8x8xf32>
    %84 = arith.divf %80, %83 : vector<8x8xf32>
    %c0_40 = arith.constant 0 : index
    %c0_41 = arith.constant 0 : index
    %85 = vector.load %arg10[%c0_40, %c0_41] : memref<8x8xf32, #tpu.memory_space<vmem>>, vector<8x8xf32>
    tpu.vector_store %arg10[%c0_40, %c0_41], %84 {strides = array<i32>} : memref<8x8xf32, #tpu.memory_space<vmem>>, vector<8x8xf32>,
    return
  }
  func.func @transform_0(%arg0: i32) -> (i32, i32) {
    %c0_i32 = arith.constant 0 : i32
    %c0_i32_0 = arith.constant 0 : i32
    return %arg0, %c0_i32 : i32, i32
  }
  func.func @transform_1(%arg0: i32) -> (i32, i32) {
    %c0_i32 = arith.constant 0 : i32
    %c0_i32_0 = arith.constant 0 : i32
    %c0_i32_1 = arith.constant 0 : i32
    return %c0_i32, %c0_i32_0 : i32, i32
  }
  func.func @transform_2(%arg0: i32) -> (i32, i32) {
    %c0_i32 = arith.constant 0 : i32
    %c0_i32_0 = arith.constant 0 : i32
    %c0_i32_1 = arith.constant 0 : i32
    return %c0_i32, %c0_i32_0 : i32, i32
  }
  func.func @transform_3(%arg0: i32) -> (i32, i32) {
    %c0_i32 = arith.constant 0 : i32
    %c0_i32_0 = arith.constant 0 : i32
    %c0_i32_1 = arith.constant 0 : i32
    return %c0_i32, %c0_i32_0 : i32, i32
  }
  func.func @transform_4(%arg0: i32) -> (i32, i32) {
    %c0_i32 = arith.constant 0 : i32
    %c0_i32_0 = arith.constant 0 : i32
    %c0_i32_1 = arith.constant 0 : i32
    return %c0_i32, %c0_i32_0 : i32, i32
  }
  func.func @transform_5(%arg0: i32) -> (i32, i32) {
    %c0_i32 = arith.constant 0 : i32
    %c0_i32_0 = arith.constant 0 : i32
    %c0_i32_1 = arith.constant 0 : i32
    return %c0_i32, %c0_i32_0 : i32, i32
  }
  func.func @transform_6(%arg0: i32) -> (i32, i32) {
    %c0_i32 = arith.constant 0 : i32
    %c0_i32_0 = arith.constant 0 : i32
    %c0_i32_1 = arith.constant 0 : i32
    return %c0_i32, %c0_i32_0 : i32, i32
  }
  func.func @transform_7(%arg0: i32) -> (i32, i32) {
    %c0_i32 = arith.constant 0 : i32
    %c0_i32_0 = arith.constant 0 : i32
    %c0_i32_1 = arith.constant 0 : i32
    return %c0_i32, %c0_i32_0 : i32, i32
  }
  func.func @transform_8(%arg0: i32) -> (i32, i32) {
    %c0_i32 = arith.constant 0 : i32
    %c0_i32_0 = arith.constant 0 : i32
    %c0_i32_1 = arith.constant 0 : i32
    return %c0_i32, %c0_i32_0 : i32, i32
  }
  func.func @transform_9(%arg0: i32) -> (i32, i32) {
    %c0_i32 = arith.constant 0 : i32
    %c0_i32_0 = arith.constant 0 : i32
    return %arg0, %c0_i32 : i32, i32
  }
}

</mosaic_0001>

<llo_original>
// kernel: neural_network_forward.1
$region0: #{neural_network_forward.1}
  #allocation0 [shape = 'u32[]', space=smem, size = 0x4, offset = 0x4, fixed_abs, tag = 'smem constant byte address 0x4 - core index']
  #allocation1 [shape = 'u32[144,128]{1,0:T(1,128)}', space=vmem, size = 0x12000, scoped, tag = 'internal scratch']
  %s0 = inlined_call_operand.vmem [shape: f32[8,16], index: 0, kind: input, shape index: {}]
  %s1 = inlined_call_operand.vmem [shape: bf16[16,64], index: 1, kind: input, shape index: {}]
  %s2 = inlined_call_operand.vmem [shape: f32[1,64], index: 2, kind: input, shape index: {}]
  %s3 = inlined_call_operand.vmem [shape: bf16[64,64], index: 3, kind: input, shape index: {}]
  %s4 = inlined_call_operand.vmem [shape: f32[1,64], index: 4, kind: input, shape index: {}]
  %s5 = inlined_call_operand.hbm [shape: bf16[64,64], index: 5, kind: input, shape index: {}]
  %s6 = inlined_call_operand.vmem [shape: f32[1,64], index: 6, kind: input, shape index: {}]
  %s7 = inlined_call_operand.vmem [shape: bf16[64,8], index: 7, kind: input, shape index: {}]
  %s8 = inlined_call_operand.vmem [shape: f32[1,8], index: 8, kind: input, shape index: {}]
  %s9 = inlined_call_operand.hbm [shape: f32[8,8], index: 9, kind: output, shape index: {}]
  %s10 = sld [smem:[#allocation0]]
  $region50: #{neural_network_forward.1} parent=0
    _
  %s12 = ssub.s32 1, %s10
  %s13 = scalar_select 0, %s12, %s10
  $region1: #{neural_network_forward.1} parent=0
    #allocation2 [shape = 'u8[16384]{0}', space=vmem, size = 0x4000, scoped, tag = 'input window, operand 5, single buffered']
    #allocation3 [shape = 's32[1]{0}', space=sflag, size = 0x4, scoped, tag = 'scoped memory for neural_network_forward.1']
    #allocation4 [shape = 's32[1]{0}', space=sflag, size = 0x4, scoped, tag = 'scoped memory for neural_network_forward.1']
    #allocation5 [shape = 'u8[4096]{0}', space=vmem, size = 0x1000, scoped, tag = 'output window, operand 0, single buffered']
    %14 = vsyncpa [#allocation3], 0
    %15 = vsyncpa [#allocation4], 0
    // Predicated region
    $region2: #{neural_network_forward.1} parent=1 // pred_check
      _
    $region3: #{neural_network_forward.1} parent=1 // pred_check_branch
      %17 = sbr.rel (0) target = $region5
    $region4: #{neural_network_forward.1} parent=1 // pred_region
      _
    $region5: #{neural_network_forward.1} parent=1 // pred_fallthru
      _
    // Predicated region
    $region6: #{neural_network_forward.1} parent=1 // pred_check
      _
    $region7: #{neural_network_forward.1} parent=1 // pred_check_branch
      %19 = sbr.rel (0) target = $region9
    $region8: #{neural_network_forward.1} parent=1 // pred_region
      _
    $region9: #{neural_network_forward.1} parent=1 // pred_fallthru
      _
    // Predicated region
    $region10: #{neural_network_forward.1} parent=1 // pred_check
      _
    $region11: #{neural_network_forward.1} parent=1 // pred_check_branch
      %21 = sbr.rel (0) target = $region13
    $region12: #{neural_network_forward.1} parent=1 // pred_region
      _
    $region13: #{neural_network_forward.1} parent=1 // pred_fallthru
      _
    // Predicated region
    $region14: #{neural_network_forward.1} parent=1 // pred_check
      _
    $region15: #{neural_network_forward.1} parent=1 // pred_check_branch
      %23 = sbr.rel (0) target = $region17
    $region16: #{neural_network_forward.1} parent=1 // pred_region
      _
    $region17: #{neural_network_forward.1} parent=1 // pred_fallthru
      _
    // Predicated region
    $region18: #{neural_network_forward.1} parent=1 // pred_check
      _
    $region19: #{neural_network_forward.1} parent=1 // pred_check_branch
      %25 = sbr.rel (0) target = $region21
    $region20: #{neural_network_forward.1} parent=1 // pred_region
      _
    $region21: #{neural_network_forward.1} parent=1 // pred_fallthru
      _
    // Predicated region
    $region22: #{neural_network_forward.1} parent=1 // pred_check
      _
    $region23: #{neural_network_forward.1} parent=1 // pred_check_branch
      %27 = sbr.rel (0) target = $region25
    $region24: #{neural_network_forward.1} parent=1 // pred_region
      %s29 = ssub.s32 512, 512
      %30 = vsyncadd [#allocation3], %s29
      %s31 = sshll.u32 [#allocation2], 4
      %s32 = int_to_ptr.vmem [resolvable:$true] %s31
      %37 = dma.hbm_to_vmem [thread:$0]  %s5, 512, %s32, [#allocation3], 64, 64, 4
    $region25: #{neural_network_forward.1} parent=1 // pred_fallthru
      _
    // Predicated region
    $region26: #{neural_network_forward.1} parent=1 // pred_check
      _
    $region27: #{neural_network_forward.1} parent=1 // pred_check_branch
      %39 = sbr.rel (0) target = $region29
    $region28: #{neural_network_forward.1} parent=1 // pred_region
      _
    $region29: #{neural_network_forward.1} parent=1 // pred_fallthru
      _
    // Predicated region
    $region30: #{neural_network_forward.1} parent=1 // pred_check
      _
    $region31: #{neural_network_forward.1} parent=1 // pred_check_branch
      %41 = sbr.rel (0) target = $region33
    $region32: #{neural_network_forward.1} parent=1 // pred_region
      _
    $region33: #{neural_network_forward.1} parent=1 // pred_fallthru
      _
    // Predicated region
    $region34: #{neural_network_forward.1} parent=1 // pred_check
      _
    $region35: #{neural_network_forward.1} parent=1 // pred_check_branch
      %43 = sbr.rel (0) target = $region37
    $region36: #{neural_network_forward.1} parent=1 // pred_region
      _
    $region37: #{neural_network_forward.1} parent=1 // pred_fallthru
      _
    // Predicated region
    $region38: #{neural_network_forward.1} parent=1 // pred_check
      _
    $region39: #{neural_network_forward.1} parent=1 // pred_check_branch
      %45 = sbr.rel (0) target = $region41
    $region40: #{neural_network_forward.1} parent=1 // pred_region
      %46 = dma.done [#allocation3], 512
    $region41: #{neural_network_forward.1} parent=1 // pred_fallthru
      _
    %v48 = vld [vmem:[%s0] sm:$0xff]
    %v49 = vpack.c.bf16 %v48, %v48
    %v50 = vld [vmem:[%s1] sm:$0xf]
    %v51 = vld [vmem:[%s1 + $0x4] sm:$0xf]
    %v52 = vld [vmem:[%s2] sm:$0x1]
    %v54 = vlaneseq
    %v55 = vshrl.u32 %v54, 7
    %v56 = vsub.s32 0, %v55
    %v57 = vrot.slane %v52, %v56
    %v61 = vunpack.c.l.b16 %v50
    %v62 = vunpack.c.l.b16 %v51
    %v63 = vpack.c.b16 %v62, %v61
    %vm65 = vcmask 130048
    %v67 = vsel %vm65, %v49, 0
    %69 = vmatprep.subr.bf16.mxu0 0
    %70 = vmatpush1.bf16.msra.mxu0 %v63
    %71 = vmatprep.subr.bf16.mxu0 0
    %72 = vmatpush1.bf16.msra.mxu0 0
    %73 = vmatprep.subr.bf16.mxu0 0
    %74 = vmatpush1.bf16.msra.mxu0 0
    %75 = vmatprep.subr.bf16.mxu0 0
    %76 = vmatpush1.bf16.msra.mxu0 0
    %77 = vmatprep.subr.bf16.mxu0 0
    %78 = vmatpush1.bf16.msra.mxu0 0
    %79 = vmatprep.subr.bf16.mxu0 0
    %80 = vmatpush1.bf16.msra.mxu0 0
    %81 = vmatprep.subr.bf16.mxu0 0
    %82 = vmatpush1.bf16.msra.mxu0 0
    %83 = vmatprep.subr.bf16.mxu0 0
    %84 = vmatpush1.bf16.msra.mxu0 0
    %85 = vmatprep.subr.bf16.mxu0 0
    %86 = vmatpush1.bf16.msra.mxu0 0
    %87 = vmatprep.subr.bf16.mxu0 0
    %88 = vmatpush1.bf16.msra.mxu0 0
    %89 = vmatprep.subr.bf16.mxu0 0
    %90 = vmatpush1.bf16.msra.mxu0 0
    %91 = vmatprep.subr.bf16.mxu0 0
    %92 = vmatpush1.bf16.msra.mxu0 0
    %93 = vmatprep.subr.bf16.mxu0 0
    %94 = vmatpush1.bf16.msra.mxu0 0
    %95 = vmatprep.subr.bf16.mxu0 0
    %96 = vmatpush1.bf16.msra.mxu0 0
    %97 = vmatprep.subr.bf16.mxu0 0
    %98 = vmatpush1.bf16.msra.mxu0 0
    %99 = vmatprep.subr.bf16.mxu0 0
    %100 = vmatpush1.bf16.msra.mxu0 0
    %101 = vmatprep.mubr.bf16.mxu0 0
    %102 = vmatmul.mubr.bf16.gmra.mrb[0].mxu0 %v67
    %v103 = vpop.f32.mrb[0].mxu0
    %v104 = vadd.f32 %v57, %v103
    %v105 = vpop.f32.mrb[0].mxu0
    %v106 = vpop.f32.mrb[0].mxu0
    %v107 = vpop.f32.mrb[0].mxu0
    %108 = vdwg.mxu0
    %v109 = vmin.f32 %v104, 20.0
    %v110 = vmul.f32 %v109, 1.442695
    %v111 = vpow.pop %v110
    %v112 = vadd.f32 %v111, 1.0
    %v113 = vmul.f32 %v112, %v112
    %v114 = vsub.f32 %v113, 1.0
    %v115 = vmul.f32 %v104, %v114
    %v116 = vadd.f32 %v113, 1.0
    %v117 = vrcp.pop %v116
    %v118 = vmul.f32 %v115, %v117
    %vm119 = vcmp.gt.f32.partialorder %v104, 20.0
    %v120 = vsel %vm119, %v104, %v118
    %v121 = vpack.c.bf16 %v120, %v120
    %v122 = vld [vmem:[%s3] sm:$0xf]
    %v123 = vld [vmem:[%s3 + $0x4] sm:$0xf]
    %v124 = vld [vmem:[%s3 + $0x8] sm:$0xf]
    %v125 = vld [vmem:[%s3 + $0xc] sm:$0xf]
    %v126 = vld [vmem:[%s3 + $0x10] sm:$0xf]
    %v127 = vld [vmem:[%s3 + $0x14] sm:$0xf]
    %v128 = vld [vmem:[%s3 + $0x18] sm:$0xf]
    %v129 = vld [vmem:[%s3 + $0x1c] sm:$0xf]
    %v130 = vld [vmem:[%s4] sm:$0x1]
    %v132 = vlaneseq
    %v133 = vshrl.u32 %v132, 7
    %v134 = vsub.s32 0, %v133
    %v135 = vrot.slane %v130, %v134
    %v145 = vunpack.c.l.b16 %v122
    %v146 = vunpack.c.l.b16 %v123
    %v147 = vunpack.c.l.b16 %v124
    %v148 = vunpack.c.l.b16 %v125
    %v149 = vunpack.c.l.b16 %v126
    %v150 = vunpack.c.l.b16 %v127
    %v151 = vunpack.c.l.b16 %v128
    %v152 = vunpack.c.l.b16 %v129
    %v153 = vpack.c.b16 %v146, %v145
    %v154 = vpack.c.b16 %v148, %v147
    %v155 = vpack.c.b16 %v150, %v149
    %v156 = vpack.c.b16 %v152, %v151
    %vm161 = vcmask 523264
    %v163 = vsel %vm161, %v121, 0
    %165 = vmatprep.subr.bf16.mxu0 0
    %166 = vmatpush1.bf16.msra.mxu0 %v153
    %167 = vmatprep.subr.bf16.mxu0 0
    %168 = vmatpush1.bf16.msra.mxu0 %v154
    %169 = vmatprep.subr.bf16.mxu0 0
    %170 = vmatpush1.bf16.msra.mxu0 %v155
    %171 = vmatprep.subr.bf16.mxu0 0
    %172 = vmatpush1.bf16.msra.mxu0 %v156
    %173 = vmatprep.subr.bf16.mxu0 0
    %174 = vmatpush1.bf16.msra.mxu0 0
    %175 = vmatprep.subr.bf16.mxu0 0
    %176 = vmatpush1.bf16.msra.mxu0 0
    %177 = vmatprep.subr.bf16.mxu0 0
    %178 = vmatpush1.bf16.msra.mxu0 0
    %179 = vmatprep.subr.bf16.mxu0 0
    %180 = vmatpush1.bf16.msra.mxu0 0
    %181 = vmatprep.subr.bf16.mxu0 0
    %182 = vmatpush1.bf16.msra.mxu0 0
    %183 = vmatprep.subr.bf16.mxu0 0
    %184 = vmatpush1.bf16.msra.mxu0 0
    %185 = vmatprep.subr.bf16.mxu0 0
    %186 = vmatpush1.bf16.msra.mxu0 0
    %187 = vmatprep.subr.bf16.mxu0 0
    %188 = vmatpush1.bf16.msra.mxu0 0
    %189 = vmatprep.subr.bf16.mxu0 0
    %190 = vmatpush1.bf16.msra.mxu0 0
    %191 = vmatprep.subr.bf16.mxu0 0
    %192 = vmatpush1.bf16.msra.mxu0 0
    %193 = vmatprep.subr.bf16.mxu0 0
    %194 = vmatpush1.bf16.msra.mxu0 0
    %195 = vmatprep.subr.bf16.mxu0 0
    %196 = vmatpush1.bf16.msra.mxu0 0
    %197 = vmatprep.mubr.bf16.mxu0 0
    %198 = vmatmul.mubr.bf16.gmra.mrb[0].mxu0 %v163
    %v199 = vpop.f32.mrb[0].mxu0
    %v200 = vadd.f32 %v135, %v199
    %v201 = vpop.f32.mrb[0].mxu0
    %v202 = vpop.f32.mrb[0].mxu0
    %v203 = vpop.f32.mrb[0].mxu0
    %204 = vdwg.mxu0
    %v205 = vmin.f32 %v200, 20.0
    %v206 = vmul.f32 %v205, 1.442695
    %v207 = vpow.pop %v206
    %v208 = vadd.f32 %v207, 1.0
    %v209 = vmul.f32 %v208, %v208
    %v210 = vsub.f32 %v209, 1.0
    %v211 = vmul.f32 %v200, %v210
    %v212 = vadd.f32 %v209, 1.0
    %v213 = vrcp.pop %v212
    %v214 = vmul.f32 %v211, %v213
    %vm215 = vcmp.gt.f32.partialorder %v200, 20.0
    %v216 = vsel %vm215, %v200, %v214
    %v217 = vpack.c.bf16 %v216, %v216
    %v218 = vld [vmem:[#allocation2] sm:$0xf]
    %v219 = vld [vmem:[#allocation2 + $0x4] sm:$0xf]
    %v220 = vld [vmem:[#allocation2 + $0x8] sm:$0xf]
    %v221 = vld [vmem:[#allocation2 + $0xc] sm:$0xf]
    %v222 = vld [vmem:[#allocation2 + $0x10] sm:$0xf]
    %v223 = vld [vmem:[#allocation2 + $0x14] sm:$0xf]
    %v224 = vld [vmem:[#allocation2 + $0x18] sm:$0xf]
    %v225 = vld [vmem:[#allocation2 + $0x1c] sm:$0xf]
    %v226 = vld [vmem:[%s6] sm:$0x1]
    %v228 = vlaneseq
    %v229 = vshrl.u32 %v228, 7
    %v230 = vsub.s32 0, %v229
    %v231 = vrot.slane %v226, %v230
    %v241 = vunpack.c.l.b16 %v218
    %v242 = vunpack.c.l.b16 %v219
    %v243 = vunpack.c.l.b16 %v220
    %v244 = vunpack.c.l.b16 %v221
    %v245 = vunpack.c.l.b16 %v222
    %v246 = vunpack.c.l.b16 %v223
    %v247 = vunpack.c.l.b16 %v224
    %v248 = vunpack.c.l.b16 %v225
    %v249 = vpack.c.b16 %v242, %v241
    %v250 = vpack.c.b16 %v244, %v243
    %v251 = vpack.c.b16 %v246, %v245
    %v252 = vpack.c.b16 %v248, %v247
    %v258 = vsel %vm161, %v217, 0
    %260 = vmatprep.subr.bf16.mxu0 0
    %261 = vmatpush1.bf16.msra.mxu0 %v249
    %262 = vmatprep.subr.bf16.mxu0 0
    %263 = vmatpush1.bf16.msra.mxu0 %v250
    %264 = vmatprep.subr.bf16.mxu0 0
    %265 = vmatpush1.bf16.msra.mxu0 %v251
    %266 = vmatprep.subr.bf16.mxu0 0
    %267 = vmatpush1.bf16.msra.mxu0 %v252
    %268 = vmatprep.subr.bf16.mxu0 0
    %269 = vmatpush1.bf16.msra.mxu0 0
    %270 = vmatprep.subr.bf16.mxu0 0
    %271 = vmatpush1.bf16.msra.mxu0 0
    %272 = vmatprep.subr.bf16.mxu0 0
    %273 = vmatpush1.bf16.msra.mxu0 0
    %274 = vmatprep.subr.bf16.mxu0 0
    %275 = vmatpush1.bf16.msra.mxu0 0
    %276 = vmatprep.subr.bf16.mxu0 0
    %277 = vmatpush1.bf16.msra.mxu0 0
    %278 = vmatprep.subr.bf16.mxu0 0
    %279 = vmatpush1.bf16.msra.mxu0 0
    %280 = vmatprep.subr.bf16.mxu0 0
    %281 = vmatpush1.bf16.msra.mxu0 0
    %282 = vmatprep.subr.bf16.mxu0 0
    %283 = vmatpush1.bf16.msra.mxu0 0
    %284 = vmatprep.subr.bf16.mxu0 0
    %285 = vmatpush1.bf16.msra.mxu0 0
    %286 = vmatprep.subr.bf16.mxu0 0
    %287 = vmatpush1.bf16.msra.mxu0 0
    %288 = vmatprep.subr.bf16.mxu0 0
    %289 = vmatpush1.bf16.msra.mxu0 0
    %290 = vmatprep.subr.bf16.mxu0 0
    %291 = vmatpush1.bf16.msra.mxu0 0
    %292 = vmatprep.mubr.bf16.mxu0 0
    %293 = vmatmul.mubr.bf16.gmra.mrb[0].mxu0 %v258
    %v294 = vpop.f32.mrb[0].mxu0
    %v295 = vadd.f32 %v231, %v294
    %v296 = vpop.f32.mrb[0].mxu0
    %v297 = vpop.f32.mrb[0].mxu0
    %v298 = vpop.f32.mrb[0].mxu0
    %299 = vdwg.mxu0
    %v300 = vmin.f32 %v295, 20.0
    %v301 = vmul.f32 %v300, 1.442695
    %v302 = vpow.pop %v301
    %v303 = vadd.f32 %v302, 1.0
    %v304 = vmul.f32 %v303, %v303
    %v305 = vsub.f32 %v304, 1.0
    %v306 = vmul.f32 %v295, %v305
    %v307 = vadd.f32 %v304, 1.0
    %v308 = vrcp.pop %v307
    %v309 = vmul.f32 %v306, %v308
    %vm310 = vcmp.gt.f32.partialorder %v295, 20.0
    %v311 = vsel %vm310, %v295, %v309
    %v312 = vpack.c.bf16 %v311, %v311
    %v313 = vld [vmem:[%s7] sm:$0xf]
    %v314 = vld [vmem:[%s7 + $0x4] sm:$0xf]
    %v315 = vld [vmem:[%s7 + $0x8] sm:$0xf]
    %v316 = vld [vmem:[%s7 + $0xc] sm:$0xf]
    %v317 = vld [vmem:[%s7 + $0x10] sm:$0xf]
    %v318 = vld [vmem:[%s7 + $0x14] sm:$0xf]
    %v319 = vld [vmem:[%s7 + $0x18] sm:$0xf]
    %v320 = vld [vmem:[%s7 + $0x1c] sm:$0xf]
    %v321 = vld [vmem:[%s8] sm:$0x1]
    %v323 = vlaneseq
    %v324 = vshrl.u32 %v323, 7
    %v325 = vsub.s32 0, %v324
    %v326 = vrot.slane %v321, %v325
    %v336 = vunpack.c.l.b16 %v313
    %v337 = vunpack.c.l.b16 %v314
    %v338 = vunpack.c.l.b16 %v315
    %v339 = vunpack.c.l.b16 %v316
    %v340 = vunpack.c.l.b16 %v317
    %v341 = vunpack.c.l.b16 %v318
    %v342 = vunpack.c.l.b16 %v319
    %v343 = vunpack.c.l.b16 %v320
    %v344 = vpack.c.b16 %v337, %v336
    %v345 = vpack.c.b16 %v339, %v338
    %v346 = vpack.c.b16 %v341, %v340
    %v347 = vpack.c.b16 %v343, %v342
    %v353 = vsel %vm161, %v312, 0
    %355 = vmatprep.subr.bf16.mxu0 0
    %356 = vmatpush1.bf16.msra.mxu0 %v344
    %357 = vmatprep.subr.bf16.mxu0 0
    %358 = vmatpush1.bf16.msra.mxu0 %v345
    %359 = vmatprep.subr.bf16.mxu0 0
    %360 = vmatpush1.bf16.msra.mxu0 %v346
    %361 = vmatprep.subr.bf16.mxu0 0
    %362 = vmatpush1.bf16.msra.mxu0 %v347
    %363 = vmatprep.subr.bf16.mxu0 0
    %364 = vmatpush1.bf16.msra.mxu0 0
    %365 = vmatprep.subr.bf16.mxu0 0
    %366 = vmatpush1.bf16.msra.mxu0 0
    %367 = vmatprep.subr.bf16.mxu0 0
    %368 = vmatpush1.bf16.msra.mxu0 0
    %369 = vmatprep.subr.bf16.mxu0 0
    %370 = vmatpush1.bf16.msra.mxu0 0
    %371 = vmatprep.subr.bf16.mxu0 0
    %372 = vmatpush1.bf16.msra.mxu0 0
    %373 = vmatprep.subr.bf16.mxu0 0
    %374 = vmatpush1.bf16.msra.mxu0 0
    %375 = vmatprep.subr.bf16.mxu0 0
    %376 = vmatpush1.bf16.msra.mxu0 0
    %377 = vmatprep.subr.bf16.mxu0 0
    %378 = vmatpush1.bf16.msra.mxu0 0
    %379 = vmatprep.subr.bf16.mxu0 0
    %380 = vmatpush1.bf16.msra.mxu0 0
    %381 = vmatprep.subr.bf16.mxu0 0
    %382 = vmatpush1.bf16.msra.mxu0 0
    %383 = vmatprep.subr.bf16.mxu0 0
    %384 = vmatpush1.bf16.msra.mxu0 0
    %385 = vmatprep.subr.bf16.mxu0 0
    %386 = vmatpush1.bf16.msra.mxu0 0
    %387 = vmatprep.mubr.bf16.mxu0 0
    %388 = vmatmul.mubr.bf16.gmra.mrb[0].mxu0 %v353
    %v389 = vpop.f32.mrb[0].mxu0
    %v390 = vadd.f32 %v326, %v389
    %v391 = vpop.f32.mrb[0].mxu0
    %v392 = vpop.f32.mrb[0].mxu0
    %v393 = vpop.f32.mrb[0].mxu0
    %394 = vdwg.mxu0
    %vm395 = vcmask 64512
    %v396 = vsel %vm395, %v390, -inf
    %397 = vmax.xlane.f32.xlu0 %v396
    %v398 = vpop.xlane.xlu0 %397
    %v399 = vsub.f32 %v390, %v398
    %v400 = vmul.f32 %v399, 1.442695
    %v401 = vpow.pop %v400
    %v402 = vsel %vm395, %v401, 0.0
    %403 = vadd.xlane.f32.xlu0 %v402
    %v404 = vpop.xlane.xlu0 %403
    %v405 = vrcp.pop %v404
    %v406 = vmul.f32 %v401, %v405
    %407 = vst.msk [vmem:[#allocation5] sm:$0xff] %vm395, %v406
    // Predicated region
    $region42: #{neural_network_forward.1} parent=1 // pred_check
      _
    $region43: #{neural_network_forward.1} parent=1 // pred_check_branch
      %409 = sbr.rel (0) target = $region45
    $region44: #{neural_network_forward.1} parent=1 // pred_region
      %s411 = ssub.s32 128, 128
      %412 = vsyncadd [#allocation4], %s411
      %s414 = sshll.u32 [#allocation5], 4
      %s415 = int_to_ptr.vmem [resolvable:$true] %s414
      %417 = dma.vmem_to_hbm [thread:$0]  %s415, 128, %s9, [#allocation4]
    $region45: #{neural_network_forward.1} parent=1 // pred_fallthru
      _
    // Predicated region
    $region46: #{neural_network_forward.1} parent=1 // pred_check
      _
    $region47: #{neural_network_forward.1} parent=1 // pred_check_branch
      %419 = sbr.rel (0) target = $region49
    $region48: #{neural_network_forward.1} parent=1 // pred_region
      %420 = dma.done [#allocation4], 128
    $region49: #{neural_network_forward.1} parent=1 // pred_fallthru
      _
    %421 = vsyncpa [#allocation3], 1
    %422 = vsyncpa [#allocation4], 1

</llo_original>
